<compile_context>
chip_gen: v7x
topology: tpu7x:2x2x1
jax: 0.10.0
libtpu: 0.0.40
codegen_flags: <defaults>
</compile_context>

<pallas_src>
import jax
import jax.numpy as jnp
from jax import lax
from jax.experimental import pallas as pl
from jax.experimental.pallas import tpu as pltpu

EPS = 1e-12  # F.normalize default eps


def _norm_linear_kernel(scale_ref, x_ref, w_ref, o_ref, acc_ref):
    # scale_ref: (1, tn) f32    x_ref: (tm, tk)    w_ref: (tn, tk)
    # o_ref:     (tm, tn)       acc_ref: (tm, tn) f32 scratch
    @pl.when(pl.program_id(2) == 0)
    def _():
        acc_ref[...] = jnp.zeros_like(acc_ref)

    # Contract x[:, k] with w[:, k] directly so the MXU consumes W in its
    # native layout (no transpose materialized); accumulate in f32.
    acc_ref[...] += lax.dot_general(
        x_ref[...],
        w_ref[...],
        dimension_numbers=(((1,), (1,)), ((), ())),
        preferred_element_type=jnp.float32,
    )

    @pl.when(pl.program_id(2) == pl.num_programs(2) - 1)
    def _():
        # Column-scale by the per-output-row inverse weight norm, then cast once.
        o_ref[...] = (acc_ref[...] * scale_ref[...]).astype(o_ref.dtype)


def _round_up(x, m):
    return (x + m - 1) // m * m


def _pick_tiles(M, K, N, x_dtype, w_dtype):
    # Sublane minimum for the second-to-last block dim is dtype dependent.
    sub = 16 if (x_dtype == jnp.bfloat16 or w_dtype == jnp.bfloat16) else 8
    tm = min(256, _round_up(M, sub))
    tn = min(256, _round_up(N, 128))
    tk = min(512, _round_up(K, 128))
    return tm, tn, tk, sub


def norm_linear(x, weight, norm_dim_in=True, *, tm=None, tn=None, tk=None):
    """x: (..., dim), weight: (dim_out, dim).  Returns (..., dim_out)."""
    dim_out, dim = weight.shape
    orig_shape = x.shape
    x2 = x.reshape(-1, dim)
    M = x2.shape[0]

    w_f32 = weight.astype(jnp.float32)
    if norm_dim_in:
        # Row norms (dim=-1): hoisted out of the grid, applied as an output
        # column scale inside the kernel's finalize step.
        norm = jnp.sqrt(jnp.sum(w_f32 * w_f32, axis=1))                  # (dim_out,)
        scale = (1.0 / jnp.maximum(norm, EPS)).reshape(1, dim_out)
        w_in = weight
    else:
        # Norm over dim=0 crosses the dim_out tiling: fold into the weight once
        # in JAX glue (pure function of W; XLA CSEs/caches it across calls).
        norm = jnp.sqrt(jnp.sum(w_f32 * w_f32, axis=0, keepdims=True))   # (1, dim)
        w_in = (w_f32 / jnp.maximum(norm, EPS)).astype(weight.dtype)
        scale = jnp.ones((1, dim_out), jnp.float32)

    dtm, dtn, dtk, sub = _pick_tiles(M, dim, dim_out, x.dtype, weight.dtype)
    tm = dtm if tm is None else _round_up(tm, sub)
    tn = dtn if tn is None else _round_up(tn, 128)
    tk = dtk if tk is None else _round_up(tk, 128)

    Mp = _round_up(M, tm)
    Kp = _round_up(dim, tk)
    Np = _round_up(dim_out, tn)

    if (Mp, Kp) != (M, dim):
        x2 = jnp.pad(x2, ((0, Mp - M), (0, Kp - dim)))
    if (Np, Kp) != (dim_out, dim):
        w_in = jnp.pad(w_in, ((0, Np - dim_out), (0, Kp - dim)))
    if Np != dim_out:
        scale = jnp.pad(scale, ((0, 0), (0, Np - dim_out)))

    grid = (Mp // tm, Np // tn, Kp // tk)
    itemsize_x = jnp.dtype(x.dtype).itemsize
    itemsize_w = jnp.dtype(weight.dtype).itemsize

    out = pl.pallas_call(
        _norm_linear_kernel,
        out_shape=jax.ShapeDtypeStruct((Mp, Np), x.dtype),
        grid_spec=pltpu.PrefetchScalarGridSpec(
            num_scalar_prefetch=0,
            grid=grid,
            in_specs=[
                pl.BlockSpec((1, tn), lambda i, j, k: (0, j)),     # inv-norm scale
                pl.BlockSpec((tm, tk), lambda i, j, k: (i, k)),    # x tile
                pl.BlockSpec((tn, tk), lambda i, j, k: (j, k)),    # W tile (row-major)
            ],
            out_specs=pl.BlockSpec((tm, tn), lambda i, j, k: (i, j)),
            scratch_shapes=[pltpu.VMEM((tm, tn), jnp.float32)],
        ),
        compiler_params=pltpu.CompilerParams(
            dimension_semantics=("parallel", "parallel", "arbitrary"),
        ),
        cost_estimate=pl.CostEstimate(
            flops=2 * Mp * Kp * Np,
            transcendentals=0,
            bytes_accessed=(
                Mp * Kp * itemsize_x
                + (Mp // tm) * Np * Kp * itemsize_w
                + Mp * Np * itemsize_x
            ),
        ),
    )(scale, x2, w_in)

    out = out[:M, :dim_out]
    return out.reshape(*orig_shape[:-1], dim_out)


def norm_linear_ref(x, weight, norm_dim_in=True):
    axis = -1 if norm_dim_in else 0
    w = weight.astype(jnp.float32)
    norm = jnp.sqrt(jnp.sum(w * w, axis=axis, keepdims=True))
    w_n = w / jnp.maximum(norm, EPS)
    return jnp.einsum("...d,od->...o", x.astype(jnp.float32), w_n).astype(x.dtype)


if __name__ == "__main__":
    key = jax.random.PRNGKey(0)
    kx, kw, kx2, kw2 = jax.random.split(key, 4)

    # Case 1: tile-aligned shapes, both normalization modes.
    batch, seq, dim, dim_out = 2, 8, 128, 256
    x = jax.random.normal(kx, (batch, seq, dim), dtype=jnp.float32)
    weight = jax.random.uniform(
        kw, (dim_out, dim), dtype=jnp.float32,
        minval=-1.0 / float(dim) ** 0.5, maxval=1.0 / float(dim) ** 0.5,
    )
    for ndi in (True, False):
        y = jax.block_until_ready(norm_linear(x, weight, norm_dim_in=ndi))
        y_ref = norm_linear_ref(x, weight, norm_dim_in=ndi)
        assert y.shape == (batch, seq, dim_out)
        assert jnp.allclose(y, y_ref, atol=1e-4, rtol=1e-4), (
            f"mismatch vs reference (norm_dim_in={ndi})")

    # Case 2: ragged shapes exercising the zero-padding path on all 3 dims.
    b2, s2, d2, o2 = 2, 5, 96, 200
    xr = jax.random.normal(kx2, (b2, s2, d2), dtype=jnp.float32)
    wr = jax.random.normal(kw2, (o2, d2), dtype=jnp.float32) * 0.1
    yr = jax.block_until_ready(norm_linear(xr, wr, norm_dim_in=True))
    yr_ref = norm_linear_ref(xr, wr, norm_dim_in=True)
    assert yr.shape == (b2, s2, o2)
    assert jnp.allclose(yr, yr_ref, atol=1e-4, rtol=1e-4), "mismatch (padded case)"

    print("KERNEL_OK")
</pallas_src>

<mosaic_0001>
module attributes {stable_mosaic.version = 11 : i64} {
  func.func @_norm_linear_kernel(%arg0: i32, %arg1: i32, %arg2: i32, %arg3: memref<1x256xf32, #tpu.memory_space<vmem>>, %arg4: memref<16x128xf32, #tpu.memory_space<vmem>>, %arg5: memref<256x128xf32, #tpu.memory_space<vmem>>, %arg6: memref<16x256xf32, #tpu.memory_space<vmem>>, %arg7: memref<16x256xf32, #tpu.memory_space<vmem>>) attributes {dimension_semantics = [#tpu.dimension_semantics<parallel>, #tpu.dimension_semantics<parallel>, #tpu.dimension_semantics<arbitrary>], iteration_bounds = array<i64: 1, 1, 1>, scalar_prefetch = 0 : i64, scratch_operands = 1 : i64, tpu.core_type = #tpu.core_type<tc>, window_params = [{transform_indices = @transform_0, window_bounds = array<i64: 1, 256>}, {transform_indices = @transform_1, window_bounds = array<i64: 16, 128>}, {transform_indices = @transform_2, window_bounds = array<i64: 256, 128>}, {transform_indices = @transform_3, window_bounds = array<i64: 16, 256>}]} {
    %c0_i32 = arith.constant 0 : i32
    %0 = arith.cmpi eq, %arg2, %c0_i32 : i32
    %1 = arith.extui %0 : i1 to i32
    %c0_i32_0 = arith.constant 0 : i32
    %2 = arith.cmpi ne, %1, %c0_i32_0 : i32
    scf.if %2 {
      %cst_10 = arith.constant 0.000000e+00 : f32
      %12 = vector.broadcast %cst_10 : f32 to vector<16x256xf32>
      %c0_11 = arith.constant 0 : index
      %c0_12 = arith.constant 0 : index
      %13 = vector.load %arg7[%c0_11, %c0_12] : memref<16x256xf32, #tpu.memory_space<vmem>>, vector<16x256xf32>
      tpu.vector_store %arg7[%c0_11, %c0_12], %12 {strides = array<i32>} : memref<16x256xf32, #tpu.memory_space<vmem>>, vector<16x256xf32>,
    } else {
    }
    %c0 = arith.constant 0 : index
    %c0_1 = arith.constant 0 : index
    %3 = vector.load %arg7[%c0, %c0_1] : memref<16x256xf32, #tpu.memory_space<vmem>>, vector<16x256xf32>
    %c0_2 = arith.constant 0 : index
    %c0_3 = arith.constant 0 : index
    %4 = vector.load %arg4[%c0_2, %c0_3] : memref<16x128xf32, #tpu.memory_space<vmem>>, vector<16x128xf32>
    %c0_4 = arith.constant 0 : index
    %c0_5 = arith.constant 0 : index
    %5 = vector.load %arg5[%c0_4, %c0_5] : memref<256x128xf32, #tpu.memory_space<vmem>>, vector<256x128xf32>
    %cst = arith.constant dense<0.000000e+00> : vector<16x256xf32>
    %6 = tpu.matmul %4, %5, %cst {dimension_numbers = #tpu.dot_dimension_numbers<[1], [1], [0], [0], [0, 0, 1, 0], [], []>} : vector<16x128xf32>, vector<256x128xf32>, vector<16x256xf32> -> vector<16x256xf32>
    %7 = arith.addf %3, %6 : vector<16x256xf32>
    %c0_6 = arith.constant 0 : index
    %c0_7 = arith.constant 0 : index
    %8 = vector.load %arg7[%c0_6, %c0_7] : memref<16x256xf32, #tpu.memory_space<vmem>>, vector<16x256xf32>
    tpu.vector_store %arg7[%c0_6, %c0_7], %7 {strides = array<i32>} : memref<16x256xf32, #tpu.memory_space<vmem>>, vector<16x256xf32>,
    %c0_i32_8 = arith.constant 0 : i32
    %9 = arith.cmpi eq, %arg2, %c0_i32_8 : i32
    %10 = arith.extui %9 : i1 to i32
    %c0_i32_9 = arith.constant 0 : i32
    %11 = arith.cmpi ne, %10, %c0_i32_9 : i32
    scf.if %11 {
      %c0_10 = arith.constant 0 : index
      %c0_11 = arith.constant 0 : index
      %12 = vector.load %arg7[%c0_10, %c0_11] : memref<16x256xf32, #tpu.memory_space<vmem>>, vector<16x256xf32>
      %c0_12 = arith.constant 0 : index
      %c0_13 = arith.constant 0 : index
      %13 = vector.load %arg3[%c0_12, %c0_13] : memref<1x256xf32, #tpu.memory_space<vmem>>, vector<1x256xf32>
      %14 = vector.broadcast %13 : vector<1x256xf32> to vector<16x256xf32>
      %15 = arith.mulf %12, %14 : vector<16x256xf32>
      %c0_14 = arith.constant 0 : index
      %c0_15 = arith.constant 0 : index
      %16 = vector.load %arg6[%c0_14, %c0_15] : memref<16x256xf32, #tpu.memory_space<vmem>>, vector<16x256xf32>
      tpu.vector_store %arg6[%c0_14, %c0_15], %15 {strides = array<i32>} : memref<16x256xf32, #tpu.memory_space<vmem>>, vector<16x256xf32>,
    } else {
    }
    return
  }
  func.func @transform_0(%arg0: i32, %arg1: i32, %arg2: i32) -> (i32, i32) {
    %c0_i32 = arith.constant 0 : i32
    %c0_i32_0 = arith.constant 0 : i32
    return %c0_i32, %arg1 : i32, i32
  }
  func.func @transform_1(%arg0: i32, %arg1: i32, %arg2: i32) -> (i32, i32) {
    %c0_i32 = arith.constant 0 : i32
    return %arg0, %arg2 : i32, i32
  }
  func.func @transform_2(%arg0: i32, %arg1: i32, %arg2: i32) -> (i32, i32) {
    %c0_i32 = arith.constant 0 : i32
    return %arg1, %arg2 : i32, i32
  }
  func.func @transform_3(%arg0: i32, %arg1: i32, %arg2: i32) -> (i32, i32) {
    %c0_i32 = arith.constant 0 : i32
    return %arg0, %arg1 : i32, i32
  }
}

</mosaic_0001>

<llo_original>
// kernel: tpu_custom_call.1
$region0: #{tpu_custom_call.1}
  #allocation0 [shape = 'u32[]', space=smem, size = 0x4, offset = 0x4, fixed_abs, tag = 'smem constant byte address 0x4 - core index']
  #allocation1 [shape = 'u32[144,128]{1,0:T(1,128)}', space=vmem, size = 0x12000, scoped, tag = 'internal scratch']
  #allocation2 [shape = 'f32[16,256]{1,0:T(8,128)}', space=vmem, size = 0x4000, scoped, tag = 'scratch operand']
  %s0 = inlined_call_operand.hbm [shape: f32[1,256], index: 0, kind: input, shape index: {}]
  %s1 = inlined_call_operand.hbm [shape: f32[16,128], index: 1, kind: input, shape index: {}]
  %s2 = inlined_call_operand.hbm [shape: f32[256,128], index: 2, kind: input, shape index: {}]
  %s3 = inlined_call_operand.hbm [shape: f32[16,256], index: 3, kind: output, shape index: {}]
  %s4 = sld [smem:[#allocation0]]
  $region42: #{tpu_custom_call.1} parent=0
    _
  %s6 = ssub.s32 1, %s4
  %s7 = scalar_select 0, %s6, %s4
  $region1: #{tpu_custom_call.1} parent=0
    #allocation3 [shape = 'u8[1024]{0}', space=vmem, size = 0x400, scoped, tag = 'input window, operand 0, single buffered']
    #allocation4 [shape = 's32[1]{0}', space=sflag, size = 0x4, scoped, tag = 'scoped memory for tpu_custom_call.1']
    #allocation5 [shape = 's32[1]{0}', space=sflag, size = 0x4, scoped, tag = 'scoped memory for tpu_custom_call.1']
    #allocation6 [shape = 'u8[8192]{0}', space=vmem, size = 0x2000, scoped, tag = 'input window, operand 1, single buffered']
    #allocation7 [shape = 's32[1]{0}', space=sflag, size = 0x4, scoped, tag = 'scoped memory for tpu_custom_call.1']
    #allocation8 [shape = 'u8[131072]{0}', space=vmem, size = 0x20000, scoped, tag = 'input window, operand 2, single buffered']
    #allocation9 [shape = 'u8[16384]{0}', space=vmem, size = 0x4000, scoped, tag = 'output window, operand 0, single buffered']
    %8 = vsyncpa [#allocation4], 0
    %9 = vsyncpa [#allocation7], 0
    %10 = vsyncpa [#allocation5], 0
    // Predicated region
    $region2: #{tpu_custom_call.1} parent=1 // pred_check
      _
    $region3: #{tpu_custom_call.1} parent=1 // pred_check_branch
      %12 = sbr.rel (0) target = $region5
    $region4: #{tpu_custom_call.1} parent=1 // pred_region
      %s14 = ssub.s32 32, 32
      %15 = vsyncadd [#allocation4], %s14
      %s17 = sshll.u32 [#allocation3], 4
      %s18 = int_to_ptr.vmem [resolvable:$true] %s17
      %20 = dma.hbm_to_vmem [thread:$0]  %s0, 32, %s18, [#allocation4]
    $region5: #{tpu_custom_call.1} parent=1 // pred_fallthru
      _
    // Predicated region
    $region6: #{tpu_custom_call.1} parent=1 // pred_check
      _
    $region7: #{tpu_custom_call.1} parent=1 // pred_check_branch
      %22 = sbr.rel (0) target = $region9
    $region8: #{tpu_custom_call.1} parent=1 // pred_region
      %s24 = ssub.s32 256, 256
      %25 = vsyncadd [#allocation7], %s24
      %s26 = sshll.u32 [#allocation6], 4
      %s27 = int_to_ptr.vmem [resolvable:$true] %s26
      %32 = dma.hbm_to_vmem [thread:$0]  %s1, 256, %s27, [#allocation7], 128, 128, 8
    $region9: #{tpu_custom_call.1} parent=1 // pred_fallthru
      _
    // Predicated region
    $region10: #{tpu_custom_call.1} parent=1 // pred_check
      _
    $region11: #{tpu_custom_call.1} parent=1 // pred_check_branch
      %34 = sbr.rel (0) target = $region13
    $region12: #{tpu_custom_call.1} parent=1 // pred_region
      %s36 = ssub.s32 4096, 4096
      %37 = vsyncadd [#allocation7], %s36
      %s38 = sshll.u32 [#allocation8], 4
      %s39 = int_to_ptr.vmem [resolvable:$true] %s38
      %44 = dma.hbm_to_vmem [thread:$0]  %s2, 4096, %s39, [#allocation7], 128, 128, 8
    $region13: #{tpu_custom_call.1} parent=1 // pred_fallthru
      _
    // Predicated region
    $region14: #{tpu_custom_call.1} parent=1 // pred_check
      _
    $region15: #{tpu_custom_call.1} parent=1 // pred_check_branch
      %46 = sbr.rel (0) target = $region17
    $region16: #{tpu_custom_call.1} parent=1 // pred_region
      %47 = dma.done [#allocation4], 32
    $region17: #{tpu_custom_call.1} parent=1 // pred_fallthru
      _
    // Predicated region
    $region18: #{tpu_custom_call.1} parent=1 // pred_check
      _
    $region19: #{tpu_custom_call.1} parent=1 // pred_check_branch
      %49 = sbr.rel (0) target = $region21
    $region20: #{tpu_custom_call.1} parent=1 // pred_region
      %50 = dma.done [#allocation7], 256
    $region21: #{tpu_custom_call.1} parent=1 // pred_fallthru
      _
    // Predicated region
    $region22: #{tpu_custom_call.1} parent=1 // pred_check
      _
    $region23: #{tpu_custom_call.1} parent=1 // pred_check_branch
      %52 = sbr.rel (0) target = $region25
    $region24: #{tpu_custom_call.1} parent=1 // pred_region
      %53 = dma.done [#allocation7], 4096
    $region25: #{tpu_custom_call.1} parent=1 // pred_fallthru
      _
    %p54 = scmp.eq.s32.totalorder 0, 0
    // Predicated region
    $region26: #{tpu_custom_call.1} parent=1 // pred_check
      %p55 = pneg %p54
    $region27: #{tpu_custom_call.1} parent=1 // pred_check_branch
      %57 = sbr.rel (%p55) target = $region29
    $region28: #{tpu_custom_call.1} parent=1 // pred_region
      %58 = vst [vmem:[#allocation2] sm:$0xff] 0.0
      %59 = vst [vmem:[#allocation2 + $0x8] sm:$0xff] 0.0
      %60 = vst [vmem:[#allocation2 + $0x10] sm:$0xff] 0.0
      %61 = vst [vmem:[#allocation2 + $0x18] sm:$0xff] 0.0
    $region29: #{tpu_custom_call.1} parent=1 // pred_fallthru
      _
    %v62 = vld [vmem:[#allocation2] sm:$0xff]
    %v63 = vld [vmem:[#allocation2 + $0x8] sm:$0xff]
    %v64 = vld [vmem:[#allocation2 + $0x10] sm:$0xff]
    %v65 = vld [vmem:[#allocation2 + $0x18] sm:$0xff]
    %v66 = vld [vmem:[#allocation6] sm:$0xff]
    %v67 = vld [vmem:[#allocation6 + $0x8] sm:$0xff]
    %v68 = vld [vmem:[#allocation8] sm:$0xff]
    %v69 = vld [vmem:[#allocation8 + $0x8] sm:$0xff]
    %v70 = vld [vmem:[#allocation8 + $0x10] sm:$0xff]
    %v71 = vld [vmem:[#allocation8 + $0x18] sm:$0xff]
    %v72 = vld [vmem:[#allocation8 + $0x20] sm:$0xff]
    %v73 = vld [vmem:[#allocation8 + $0x28] sm:$0xff]
    %v74 = vld [vmem:[#allocation8 + $0x30] sm:$0xff]
    %v75 = vld [vmem:[#allocation8 + $0x38] sm:$0xff]
    %v76 = vld [vmem:[#allocation8 + $0x40] sm:$0xff]
    %v77 = vld [vmem:[#allocation8 + $0x48] sm:$0xff]
    %v78 = vld [vmem:[#allocation8 + $0x50] sm:$0xff]
    %v79 = vld [vmem:[#allocation8 + $0x58] sm:$0xff]
    %v80 = vld [vmem:[#allocation8 + $0x60] sm:$0xff]
    %v81 = vld [vmem:[#allocation8 + $0x68] sm:$0xff]
    %v82 = vld [vmem:[#allocation8 + $0x70] sm:$0xff]
    %v83 = vld [vmem:[#allocation8 + $0x78] sm:$0xff]
    %v84 = vld [vmem:[#allocation8 + $0x80] sm:$0xff]
    %v85 = vld [vmem:[#allocation8 + $0x88] sm:$0xff]
    %v86 = vld [vmem:[#allocation8 + $0x90] sm:$0xff]
    %v87 = vld [vmem:[#allocation8 + $0x98] sm:$0xff]
    %v88 = vld [vmem:[#allocation8 + $0xa0] sm:$0xff]
    %v89 = vld [vmem:[#allocation8 + $0xa8] sm:$0xff]
    %v90 = vld [vmem:[#allocation8 + $0xb0] sm:$0xff]
    %v91 = vld [vmem:[#allocation8 + $0xb8] sm:$0xff]
    %v92 = vld [vmem:[#allocation8 + $0xc0] sm:$0xff]
    %v93 = vld [vmem:[#allocation8 + $0xc8] sm:$0xff]
    %v94 = vld [vmem:[#allocation8 + $0xd0] sm:$0xff]
    %v95 = vld [vmem:[#allocation8 + $0xd8] sm:$0xff]
    %v96 = vld [vmem:[#allocation8 + $0xe0] sm:$0xff]
    %v97 = vld [vmem:[#allocation8 + $0xe8] sm:$0xff]
    %v98 = vld [vmem:[#allocation8 + $0xf0] sm:$0xff]
    %v99 = vld [vmem:[#allocation8 + $0xf8] sm:$0xff]
    %100 = vmatprep.subr.mxu0 0.0
    %101 = vmatpush1.xpose.msra.mxu0 %v68
    %102 = vmatprep.subr.mxu0 0.0
    %103 = vmatpush1.xpose.msra.mxu0 %v69
    %104 = vmatprep.subr.mxu0 0.0
    %105 = vmatpush1.xpose.msra.mxu0 %v70
    %106 = vmatprep.subr.mxu0 0.0
    %107 = vmatpush1.xpose.msra.mxu0 %v71
    %108 = vmatprep.subr.mxu0 0.0
    %109 = vmatpush1.xpose.msra.mxu0 %v72
    %110 = vmatprep.subr.mxu0 0.0
    %111 = vmatpush1.xpose.msra.mxu0 %v73
    %112 = vmatprep.subr.mxu0 0.0
    %113 = vmatpush1.xpose.msra.mxu0 %v74
    %114 = vmatprep.subr.mxu0 0.0
    %115 = vmatpush1.xpose.msra.mxu0 %v75
    %116 = vmatprep.subr.mxu0 0.0
    %117 = vmatpush1.xpose.msra.mxu0 %v76
    %118 = vmatprep.subr.mxu0 0.0
    %119 = vmatpush1.xpose.msra.mxu0 %v77
    %120 = vmatprep.subr.mxu0 0.0
    %121 = vmatpush1.xpose.msra.mxu0 %v78
    %122 = vmatprep.subr.mxu0 0.0
    %123 = vmatpush1.xpose.msra.mxu0 %v79
    %124 = vmatprep.subr.mxu0 0.0
    %125 = vmatpush1.xpose.msra.mxu0 %v80
    %126 = vmatprep.subr.mxu0 0.0
    %127 = vmatpush1.xpose.msra.mxu0 %v81
    %128 = vmatprep.subr.mxu0 0.0
    %129 = vmatpush1.xpose.msra.mxu0 %v82
    %130 = vmatprep.subr.mxu0 0.0
    %131 = vmatpush1.xpose.msra.mxu0 %v83
    %132 = vmatprep.subr.mxu0 0.0
    %133 = vmatpush1.xpose.msra.mxu0 %v84
    %134 = vmatprep.subr.mxu0 0.0
    %135 = vmatpush1.xpose.msra.mxu0 %v85
    %136 = vmatprep.subr.mxu0 0.0
    %137 = vmatpush1.xpose.msra.mxu0 %v86
    %138 = vmatprep.subr.mxu0 0.0
    %139 = vmatpush1.xpose.msra.mxu0 %v87
    %140 = vmatprep.subr.mxu0 0.0
    %141 = vmatpush1.xpose.msra.mxu0 %v88
    %142 = vmatprep.subr.mxu0 0.0
    %143 = vmatpush1.xpose.msra.mxu0 %v89
    %144 = vmatprep.subr.mxu0 0.0
    %145 = vmatpush1.xpose.msra.mxu0 %v90
    %146 = vmatprep.subr.mxu0 0.0
    %147 = vmatpush1.xpose.msra.mxu0 %v91
    %148 = vmatprep.subr.mxu0 0.0
    %149 = vmatpush1.xpose.msra.mxu0 %v92
    %150 = vmatprep.subr.mxu0 0.0
    %151 = vmatpush1.xpose.msra.mxu0 %v93
    %152 = vmatprep.subr.mxu0 0.0
    %153 = vmatpush1.xpose.msra.mxu0 %v94
    %154 = vmatprep.subr.mxu0 0.0
    %155 = vmatpush1.xpose.msra.mxu0 %v95
    %156 = vmatprep.subr.mxu0 0.0
    %157 = vmatpush1.xpose.msra.mxu0 %v96
    %158 = vmatprep.subr.mxu0 0.0
    %159 = vmatpush1.xpose.msra.mxu0 %v97
    %160 = vmatprep.subr.mxu0 0.0
    %161 = vmatpush1.xpose.msra.mxu0 %v98
    %162 = vmatprep.subr.mxu0 0.0
    %163 = vmatpush1.xpose.msra.mxu0 %v99
    %164 = vmatprep.mubr.f32.mxu0 0.0
    %165 = vmatmul.mubr.f32.gmra.mrb[0].mxu0 %v66
    %v166 = vpop.f32.mrb[0].mxu0
    %v167 = vadd.f32 0.0, %v166
    %v168 = vpop.f32.mrb[0].mxu0
    %v169 = vadd.f32 0.0, %v168
    %170 = vmatprep.mubr.f32.mxu0 0.0
    %171 = vmatmul.mubr.f32.gmra.mrb[0].mxu0 %v67
    %v172 = vpop.f32.mrb[0].mxu0
    %v173 = vadd.f32 0.0, %v172
    %v174 = vpop.f32.mrb[0].mxu0
    %v175 = vadd.f32 0.0, %v174
    %176 = vdwg.mxu0
    %v177 = vadd.f32 %v62, %v167
    %v178 = vadd.f32 %v63, %v169
    %v179 = vadd.f32 %v64, %v173
    %v180 = vadd.f32 %v65, %v175
    %181 = vst [vmem:[#allocation2] sm:$0xff] %v177
    %182 = vst [vmem:[#allocation2 + $0x8] sm:$0xff] %v178
    %183 = vst [vmem:[#allocation2 + $0x10] sm:$0xff] %v179
    %184 = vst [vmem:[#allocation2 + $0x18] sm:$0xff] %v180
    // Predicated region
    $region30: #{tpu_custom_call.1} parent=1 // pred_check
      %p185 = pneg %p54
    $region31: #{tpu_custom_call.1} parent=1 // pred_check_branch
      %187 = sbr.rel (%p185) target = $region33
    $region32: #{tpu_custom_call.1} parent=1 // pred_region
      %v188 = vld [vmem:[#allocation2] sm:$0xff]
      %v189 = vld [vmem:[#allocation2 + $0x8] sm:$0xff]
      %v190 = vld [vmem:[#allocation2 + $0x10] sm:$0xff]
      %v191 = vld [vmem:[#allocation2 + $0x18] sm:$0xff]
      %v192 = vld [vmem:[#allocation3] sm:$0x3]
      %v194 = vlaneseq
      %v195 = vshrl.u32 %v194, 7
      %v196 = vsub.s32 0, %v195
      %v197 = vrot.slane %v192, %v196
      %v198 = vlaneseq
      %v199 = vshrl.u32 %v198, 7
      %v200 = vsub.s32 1, %v199
      %v201 = vrot.slane %v192, %v200
      %v204 = vmul.f32 %v188, %v197
      %v205 = vmul.f32 %v189, %v201
      %v206 = vmul.f32 %v190, %v197
      %v207 = vmul.f32 %v191, %v201
      %208 = vst [vmem:[#allocation9] sm:$0xff] %v204
      %209 = vst [vmem:[#allocation9 + $0x8] sm:$0xff] %v205
      %210 = vst [vmem:[#allocation9 + $0x10] sm:$0xff] %v206
      %211 = vst [vmem:[#allocation9 + $0x18] sm:$0xff] %v207
    $region33: #{tpu_custom_call.1} parent=1 // pred_fallthru
      _
    // Predicated region
    $region34: #{tpu_custom_call.1} parent=1 // pred_check
      _
    $region35: #{tpu_custom_call.1} parent=1 // pred_check_branch
      %213 = sbr.rel (0) target = $region37
    $region36: #{tpu_custom_call.1} parent=1 // pred_region
      %s215 = ssub.s32 512, 512
      %216 = vsyncadd [#allocation5], %s215
      %s217 = sshll.u32 [#allocation9], 4
      %s218 = int_to_ptr.vmem [resolvable:$true] %s217
      %223 = dma.vmem_to_hbm [thread:$0]  %s218, 512, %s3, [#allocation5], 256, 256, 16
    $region37: #{tpu_custom_call.1} parent=1 // pred_fallthru
      _
    // Predicated region
    $region38: #{tpu_custom_call.1} parent=1 // pred_check
      _
    $region39: #{tpu_custom_call.1} parent=1 // pred_check_branch
      %225 = sbr.rel (0) target = $region41
    $region40: #{tpu_custom_call.1} parent=1 // pred_region
      %226 = dma.done [#allocation5], 512
    $region41: #{tpu_custom_call.1} parent=1 // pred_fallthru
      _
    %227 = vsyncpa [#allocation4], 1
    %228 = vsyncpa [#allocation7], 1
    %229 = vsyncpa [#allocation5], 1

</llo_original>
